<compile_context>
chip_gen: v7x
topology: tpu7x:2x2x1
jax: 0.10.0
libtpu: 0.0.40
codegen_flags: <defaults>
</compile_context>

<pallas_src>
import functools
import math

import jax
import jax.numpy as jnp
from jax.experimental import pallas as pl
from jax.experimental.pallas import tpu as pltpu


def _conv_relu_kernel(x_ref, w_ref, b_ref, o_ref, *, kernel_size, pad, window):
    """Fused pad + Conv1d + bias + ReLU on one lane-dense column block.

    x_ref: (F_pad, Nt)      input block; rows = zero-padded input features,
                            columns = flat (batch, time), time-minor (c = b*W + t).
    w_ref: (F_pad, K*F_pad) fused im2col weight, w[o, k*F_pad + i] = torch_w[o, i, k]
    b_ref: (F_pad, 1)       bias (f32, broadcasts over the lane/time axis)
    o_ref: (F_pad, Nt)      output block
    """
    F_pad, Nt = x_ref.shape
    K, p, W = kernel_size, pad, window

    x = x_ref[...]

    # Segment-relative time of each column.  Blocks always contain whole batch
    # elements (Nt is a multiple of W), so block-local lane index mod W is t.
    lane = jax.lax.broadcasted_iota(jnp.int32, (F_pad, Nt), dimension=1)
    t = lane % W

    # Build the im2col operand X2[k*F_pad + i, b*W + t] = x[i, b, t + k - p],
    # zero where (t + k - p) falls in the symmetric zero-pad region.  The roll
    # runs on the XLU (slack in this mem-bound kernel); masks depend only on k
    # and are computed once per grid step.  The mask also kills any cross-batch
    # / wrap-around leakage introduced by the flat-column roll.
    taps = []
    for k in range(K):                          # static unroll; K is small
        s = p - k                               # source column is c - s
        r = s % Nt
        rolled = pltpu.roll(x, shift=r, axis=1) if r else x
        valid = (t >= s) & (t < W + s)
        taps.append(jnp.where(valid, rolled, jnp.zeros_like(rolled)))
    x2 = jnp.concatenate(taps, axis=0)          # (K*F_pad, Nt), sublane-aligned

    # Single MXU contraction per grid step; f32 accumulate regardless of
    # operand dtype.  Epilogue (bias + ReLU) stays in f32 (v5e VPU has no bf16).
    acc = jnp.dot(w_ref[...], x2, preferred_element_type=jnp.float32)
    acc = acc + b_ref[...]
    o_ref[...] = jnp.maximum(acc, 0.0).astype(o_ref.dtype)


def conv_layer_forward(x, weight, bias, kernel_size, *, compute_dtype=None,
                       vmem_budget_bytes=24 * 1024 * 1024):
    """Forward pass of ConvLayer.

    x:      (B, W, F) float32 — (batch, window, features), module input layout.
    weight: (F_out, F_in, K) float32 — torch Conv1d weight layout.
    bias:   (F,) float32.
    compute_dtype: dtype of the MXU operands (x / weight).  Pass jnp.bfloat16
        on v6e/v7x for HBM-bound sizes; accumulation / bias / ReLU stay f32.
    Returns (B, W, F).
    """
    B, W, F = x.shape
    K = kernel_size
    # Symmetric pad (K-1)//2 only gives same-length output for odd K.
    assert K % 2 == 1, "ConvLayer requires odd kernel_size for same-length output"
    assert weight.shape == (F, F, K) and bias.shape == (F,)
    p = (K - 1) // 2

    if compute_dtype is None:
        compute_dtype = x.dtype

    F_pad = max(8, ((F + 7) // 8) * 8)          # sublane-aligned feature dim

    # ---- layout plumbing (wrapper side).  In a multi-layer model, keep the
    # activations in (F_pad, B*W) layout across layers to remove these
    # transposes (they are extra HBM passes at large B*W*F). ----
    total_cols = B * W
    x_t = jnp.transpose(x.reshape(total_cols, F)).astype(compute_dtype)   # (F, B*W)
    x_t = jnp.pad(x_t, ((0, F_pad - F), (0, 0)))                          # (F_pad, B*W)

    # Fused im2col weight: w_mat[o, k*F_pad + i] = weight[o, i, k], zero-padded.
    w_kfi = jnp.zeros((F_pad, K, F_pad), compute_dtype)
    w_kfi = w_kfi.at[:F, :, :F].set(
        jnp.transpose(weight, (0, 2, 1)).astype(compute_dtype))
    w_mat = w_kfi.reshape(F_pad, K * F_pad)

    b_pad = jnp.zeros((F_pad, 1), jnp.float32).at[:F, 0].set(
        bias.astype(jnp.float32))

    # ---- block sizing.  Budget counts double-buffered input + output blocks,
    # the K im2col taps, and slack for masks/accumulator (all at 4 B/elem).
    # Single grid step whenever it fits (v5e/v6e are single-TC; per-step
    # pipeline overhead dominates tiny problems). ----
    bytes_per_col = F_pad * 4 * (2 + 2 + K + 2)
    max_cols = max(W, vmem_budget_bytes // max(bytes_per_col, 1))
    if max_cols >= total_cols:
        Nt = total_cols                          # one grid step
    else:
        # Blocks must hold whole batch elements (roll/mask correctness) and be
        # lane-tile aligned (128) when tiling.
        step = W * 128 // math.gcd(W, 128)
        Nt = max(step, (max_cols // step) * step)
    grid_n = pl.cdiv(total_cols, Nt)
    padded_cols = grid_n * Nt
    if padded_cols != total_cols:
        # Pad with whole phantom batch elements of zeros; their outputs are
        # sliced off below (no reliance on boundary-block handling).
        x_t = jnp.pad(x_t, ((0, 0), (0, padded_cols - total_cols)))
    # NOTE: for very large windows where F_pad*W*(K+6)*4 approaches usable VMEM
    # (~32 MiB on v7x), add a time-axis grid with a (K-1) halo; not needed here.

    kern = functools.partial(_conv_relu_kernel, kernel_size=K, pad=p, window=W)

    out_t = pl.pallas_call(
        kern,
        out_shape=jax.ShapeDtypeStruct((F_pad, padded_cols), x.dtype),
        grid_spec=pltpu.PrefetchScalarGridSpec(
            num_scalar_prefetch=0,
            grid=(grid_n,),
            in_specs=[
                pl.BlockSpec((F_pad, Nt), lambda n: (0, n)),
                # Constant index_maps -> weight/bias stay VMEM-resident.
                pl.BlockSpec((F_pad, K * F_pad), lambda n: (0, 0)),
                pl.BlockSpec((F_pad, 1), lambda n: (0, 0)),
            ],
            out_specs=pl.BlockSpec((F_pad, Nt), lambda n: (0, n)),
        ),
        compiler_params=pltpu.CompilerParams(
            dimension_semantics=("parallel",),
            vmem_limit_bytes=32 * 1024 * 1024,   # headroom on v7x's 64 MiB VMEM
        ),
    )(x_t, w_mat, b_pad)

    out = out_t[:F, :total_cols].reshape(F, B, W)   # drop feature/column padding
    return jnp.transpose(out, (1, 2, 0))            # back to (B, W, F)


def reference_conv_layer(x, weight, bias, kernel_size):
    """Pure-JAX reference mirroring the PyTorch forward exactly."""
    B, W, F = x.shape
    p = (kernel_size - 1) // 2
    x_pad = jnp.pad(x, ((0, 0), (p, p), (0, 0)))            # pad along time
    out = jnp.broadcast_to(bias[None, None, :], (B, W, F)).astype(jnp.float32)
    for k in range(kernel_size):
        out = out + jnp.einsum("bwi,oi->bwo", x_pad[:, k:k + W, :], weight[:, :, k])
    return jnp.maximum(out, 0.0)


if __name__ == "__main__":
    # Small shapes consistent with the module: batch=2, window=16, n_features=4.
    B, W, F = 2, 16, 4
    K = 7

    key = jax.random.PRNGKey(0)
    kx, kw, kb = jax.random.split(key, 3)

    x = jax.random.normal(kx, (B, W, F), dtype=jnp.float32)

    # Conv1d-style uniform init, torch weight layout (out_ch, in_ch, K).
    bound = 1.0 / float(jnp.sqrt(jnp.float32(F * K)))
    weight = jax.random.uniform(kw, (F, F, K), jnp.float32, -bound, bound)
    bias = jax.random.uniform(kb, (F,), jnp.float32, -bound, bound)

    out = conv_layer_forward(x, weight, bias, K)
    out = jax.block_until_ready(out)

    ref = reference_conv_layer(x, weight, bias, K)
    assert out.shape == (B, W, F)
    err = float(jnp.max(jnp.abs(out - ref)))
    assert err < 1e-5, err

    print("KERNEL_OK")
</pallas_src>

<mosaic_0001>
module attributes {stable_mosaic.version = 11 : i64} {
  func.func @_conv_relu_kernel(%arg0: i32, %arg1: memref<8x32xf32, #tpu.memory_space<vmem>>, %arg2: memref<8x56xf32, #tpu.memory_space<vmem>>, %arg3: memref<8x1xf32, #tpu.memory_space<vmem>>, %arg4: memref<8x32xf32, #tpu.memory_space<vmem>>) attributes {dimension_semantics = [#tpu.dimension_semantics<parallel>], iteration_bounds = array<i64: 1>, scalar_prefetch = 0 : i64, scratch_operands = 0 : i64, tpu.core_type = #tpu.core_type<tc>, window_params = [{transform_indices = @transform_0, window_bounds = array<i64: 8, 32>}, {pipeline_mode = #tpu.pipeline_mode<synchronous>, transform_indices = @transform_1, window_bounds = array<i64: 8, 56>}, {pipeline_mode = #tpu.pipeline_mode<synchronous>, transform_indices = @transform_2, window_bounds = array<i64: 8, 1>}, {transform_indices = @transform_3, window_bounds = array<i64: 8, 32>}]} {
    %c0 = arith.constant 0 : index
    %c0_0 = arith.constant 0 : index
    %0 = vector.load %arg1[%c0, %c0_0] : memref<8x32xf32, #tpu.memory_space<vmem>>, vector<8x32xf32>
    %1 = tpu.iota {dimensions = array<i32: 1>} : vector<8x32xi32>
    %c16_i32 = arith.constant 16 : i32
    %c0_i32 = arith.constant 0 : i32
    %2 = arith.cmpi eq, %c16_i32, %c0_i32 : i32
    %c1_i32 = arith.constant 1 : i32
    %3 = arith.select %2, %c1_i32, %c16_i32 : i32
    %4 = vector.broadcast %3 : i32 to vector<8x32xi32>
    %5 = arith.remsi %1, %4 : vector<8x32xi32>
    %c0_i32_1 = arith.constant 0 : i32
    %6 = vector.broadcast %c0_i32_1 : i32 to vector<8x32xi32>
    %7 = arith.cmpi ne, %5, %6 : vector<8x32xi32>
    %c0_i32_2 = arith.constant 0 : i32
    %8 = vector.broadcast %c0_i32_2 : i32 to vector<8x32xi32>
    %9 = arith.cmpi slt, %5, %8 : vector<8x32xi32>
    %c0_i32_3 = arith.constant 0 : i32
    %10 = arith.cmpi slt, %3, %c0_i32_3 : i32
    %11 = vector.broadcast %10 : i1 to vector<8x32xi1>
    %12 = vector.broadcast %11 : vector<8x32xi1> to vector<8x32xi1>
    %13 = arith.xori %9, %12 : vector<8x32xi1>
    %14 = arith.andi %13, %7 : vector<8x32xi1>
    %15 = vector.broadcast %3 : i32 to vector<8x32xi32>
    %16 = arith.addi %5, %15 : vector<8x32xi32>
    %17 = arith.select %14, %16, %5 : vector<8x32xi1>, vector<8x32xi32>
    %c3_i32 = arith.constant 3 : i32
    %18 = tpu.dynamic_rotate %0 by %c3_i32 dim 1 : vector<8x32xf32>, i32 -> vector<8x32xf32>
    %c3_i32_4 = arith.constant 3 : i32
    %19 = vector.broadcast %c3_i32_4 : i32 to vector<8x32xi32>
    %20 = arith.cmpi sge, %17, %19 : vector<8x32xi32>
    %c19_i32 = arith.constant 19 : i32
    %21 = vector.broadcast %c19_i32 : i32 to vector<8x32xi32>
    %22 = arith.cmpi slt, %17, %21 : vector<8x32xi32>
    %23 = arith.andi %20, %22 : vector<8x32xi1>
    %cst = arith.constant 0.000000e+00 : f32
    %24 = vector.broadcast %cst : f32 to vector<8x32xf32>
    %25 = arith.select %23, %18, %24 : vector<8x32xi1>, vector<8x32xf32>
    %c2_i32 = arith.constant 2 : i32
    %26 = tpu.dynamic_rotate %0 by %c2_i32 dim 1 : vector<8x32xf32>, i32 -> vector<8x32xf32>
    %c2_i32_5 = arith.constant 2 : i32
    %27 = vector.broadcast %c2_i32_5 : i32 to vector<8x32xi32>
    %28 = arith.cmpi sge, %17, %27 : vector<8x32xi32>
    %c18_i32 = arith.constant 18 : i32
    %29 = vector.broadcast %c18_i32 : i32 to vector<8x32xi32>
    %30 = arith.cmpi slt, %17, %29 : vector<8x32xi32>
    %31 = arith.andi %28, %30 : vector<8x32xi1>
    %cst_6 = arith.constant 0.000000e+00 : f32
    %32 = vector.broadcast %cst_6 : f32 to vector<8x32xf32>
    %33 = arith.select %31, %26, %32 : vector<8x32xi1>, vector<8x32xf32>
    %c1_i32_7 = arith.constant 1 : i32
    %34 = tpu.dynamic_rotate %0 by %c1_i32_7 dim 1 : vector<8x32xf32>, i32 -> vector<8x32xf32>
    %c1_i32_8 = arith.constant 1 : i32
    %35 = vector.broadcast %c1_i32_8 : i32 to vector<8x32xi32>
    %36 = arith.cmpi sge, %17, %35 : vector<8x32xi32>
    %c17_i32 = arith.constant 17 : i32
    %37 = vector.broadcast %c17_i32 : i32 to vector<8x32xi32>
    %38 = arith.cmpi slt, %17, %37 : vector<8x32xi32>
    %39 = arith.andi %36, %38 : vector<8x32xi1>
    %cst_9 = arith.constant 0.000000e+00 : f32
    %40 = vector.broadcast %cst_9 : f32 to vector<8x32xf32>
    %41 = arith.select %39, %34, %40 : vector<8x32xi1>, vector<8x32xf32>
    %c0_i32_10 = arith.constant 0 : i32
    %42 = vector.broadcast %c0_i32_10 : i32 to vector<8x32xi32>
    %43 = arith.cmpi sge, %17, %42 : vector<8x32xi32>
    %c16_i32_11 = arith.constant 16 : i32
    %44 = vector.broadcast %c16_i32_11 : i32 to vector<8x32xi32>
    %45 = arith.cmpi slt, %17, %44 : vector<8x32xi32>
    %46 = arith.andi %43, %45 : vector<8x32xi1>
    %cst_12 = arith.constant 0.000000e+00 : f32
    %47 = vector.broadcast %cst_12 : f32 to vector<8x32xf32>
    %48 = arith.select %46, %0, %47 : vector<8x32xi1>, vector<8x32xf32>
    %c31_i32 = arith.constant 31 : i32
    %49 = tpu.dynamic_rotate %0 by %c31_i32 dim 1 : vector<8x32xf32>, i32 -> vector<8x32xf32>
    %c-1_i32 = arith.constant -1 : i32
    %50 = vector.broadcast %c-1_i32 : i32 to vector<8x32xi32>
    %51 = arith.cmpi sge, %17, %50 : vector<8x32xi32>
    %c15_i32 = arith.constant 15 : i32
    %52 = vector.broadcast %c15_i32 : i32 to vector<8x32xi32>
    %53 = arith.cmpi slt, %17, %52 : vector<8x32xi32>
    %54 = arith.andi %51, %53 : vector<8x32xi1>
    %cst_13 = arith.constant 0.000000e+00 : f32
    %55 = vector.broadcast %cst_13 : f32 to vector<8x32xf32>
    %56 = arith.select %54, %49, %55 : vector<8x32xi1>, vector<8x32xf32>
    %c30_i32 = arith.constant 30 : i32
    %57 = tpu.dynamic_rotate %0 by %c30_i32 dim 1 : vector<8x32xf32>, i32 -> vector<8x32xf32>
    %c-2_i32 = arith.constant -2 : i32
    %58 = vector.broadcast %c-2_i32 : i32 to vector<8x32xi32>
    %59 = arith.cmpi sge, %17, %58 : vector<8x32xi32>
    %c14_i32 = arith.constant 14 : i32
    %60 = vector.broadcast %c14_i32 : i32 to vector<8x32xi32>
    %61 = arith.cmpi slt, %17, %60 : vector<8x32xi32>
    %62 = arith.andi %59, %61 : vector<8x32xi1>
    %cst_14 = arith.constant 0.000000e+00 : f32
    %63 = vector.broadcast %cst_14 : f32 to vector<8x32xf32>
    %64 = arith.select %62, %57, %63 : vector<8x32xi1>, vector<8x32xf32>
    %c29_i32 = arith.constant 29 : i32
    %65 = tpu.dynamic_rotate %0 by %c29_i32 dim 1 : vector<8x32xf32>, i32 -> vector<8x32xf32>
    %c-3_i32 = arith.constant -3 : i32
    %66 = vector.broadcast %c-3_i32 : i32 to vector<8x32xi32>
    %67 = arith.cmpi sge, %17, %66 : vector<8x32xi32>
    %c13_i32 = arith.constant 13 : i32
    %68 = vector.broadcast %c13_i32 : i32 to vector<8x32xi32>
    %69 = arith.cmpi slt, %17, %68 : vector<8x32xi32>
    %70 = arith.andi %67, %69 : vector<8x32xi1>
    %cst_15 = arith.constant 0.000000e+00 : f32
    %71 = vector.broadcast %cst_15 : f32 to vector<8x32xf32>
    %72 = arith.select %70, %65, %71 : vector<8x32xi1>, vector<8x32xf32>
    %73 = tpu.concatenate %25, %33, %41, %48, %56, %64, %72 in 0 : vector<8x32xf32>, vector<8x32xf32>, vector<8x32xf32>, vector<8x32xf32>, vector<8x32xf32>, vector<8x32xf32>, vector<8x32xf32> -> vector<56x32xf32>
    %c0_16 = arith.constant 0 : index
    %c0_17 = arith.constant 0 : index
    %74 = vector.load %arg2[%c0_16, %c0_17] : memref<8x56xf32, #tpu.memory_space<vmem>>, vector<8x56xf32>
    %cst_18 = arith.constant dense<0.000000e+00> : vector<8x32xf32>
    %75 = tpu.matmul %74, %73, %cst_18 {dimension_numbers = #tpu.dot_dimension_numbers<[1], [0], [0], [1], [0, 0, 1, 1], [], []>} : vector<8x56xf32>, vector<56x32xf32>, vector<8x32xf32> -> vector<8x32xf32>
    %c0_19 = arith.constant 0 : index
    %c0_20 = arith.constant 0 : index
    %76 = vector.load %arg3[%c0_19, %c0_20] : memref<8x1xf32, #tpu.memory_space<vmem>>, vector<8x1xf32>
    %77 = vector.broadcast %76 : vector<8x1xf32> to vector<8x32xf32>
    %78 = arith.addf %75, %77 : vector<8x32xf32>
    %cst_21 = arith.constant 0.000000e+00 : f32
    %79 = vector.broadcast %cst_21 : f32 to vector<8x32xf32>
    %80 = arith.maximumf %78, %79 : vector<8x32xf32>
    %c0_22 = arith.constant 0 : index
    %c0_23 = arith.constant 0 : index
    %81 = vector.load %arg4[%c0_22, %c0_23] : memref<8x32xf32, #tpu.memory_space<vmem>>, vector<8x32xf32>
    tpu.vector_store %arg4[%c0_22, %c0_23], %80 {strides = array<i32>} : memref<8x32xf32, #tpu.memory_space<vmem>>, vector<8x32xf32>,
    return
  }
  func.func @transform_0(%arg0: i32) -> (i32, i32) {
    %c0_i32 = arith.constant 0 : i32
    %c0_i32_0 = arith.constant 0 : i32
    return %c0_i32, %arg0 : i32, i32
  }
  func.func @transform_1(%arg0: i32) -> (i32, i32) {
    %c0_i32 = arith.constant 0 : i32
    %c0_i32_0 = arith.constant 0 : i32
    %c0_i32_1 = arith.constant 0 : i32
    return %c0_i32, %c0_i32_0 : i32, i32
  }
  func.func @transform_2(%arg0: i32) -> (i32, i32) {
    %c0_i32 = arith.constant 0 : i32
    %c0_i32_0 = arith.constant 0 : i32
    %c0_i32_1 = arith.constant 0 : i32
    return %c0_i32, %c0_i32_0 : i32, i32
  }
  func.func @transform_3(%arg0: i32) -> (i32, i32) {
    %c0_i32 = arith.constant 0 : i32
    %c0_i32_0 = arith.constant 0 : i32
    return %c0_i32, %arg0 : i32, i32
  }
}

</mosaic_0001>

<llo_original>
// kernel: tpu_custom_call.1
$region0: #{tpu_custom_call.1}
  #allocation0 [shape = 'u32[]', space=smem, size = 0x4, offset = 0x4, fixed_abs, tag = 'smem constant byte address 0x4 - core index']
  #allocation1 [shape = 'u32[144,128]{1,0:T(1,128)}', space=vmem, size = 0x12000, scoped, tag = 'internal scratch']
  %s0 = inlined_call_operand.vmem [shape: f32[8,32], index: 0, kind: input, shape index: {}]
  %s1 = inlined_call_operand.hbm [shape: f32[8,56], index: 1, kind: input, shape index: {}]
  %s2 = inlined_call_operand.vmem [shape: f32[8,1], index: 2, kind: input, shape index: {}]
  %s3 = inlined_call_operand.hbm [shape: f32[8,32], index: 3, kind: output, shape index: {}]
  %s4 = sld [smem:[#allocation0]]
  $region26: #{tpu_custom_call.1} parent=0
    _
  %s6 = ssub.s32 1, %s4
  %s7 = scalar_select 0, %s6, %s4
  $region1: #{tpu_custom_call.1} parent=0
    #allocation2 [shape = 'u8[4096]{0}', space=vmem, size = 0x1000, scoped, tag = 'input window, operand 1, single buffered']
    #allocation3 [shape = 's32[1]{0}', space=sflag, size = 0x4, scoped, tag = 'scoped memory for tpu_custom_call.1']
    #allocation4 [shape = 's32[1]{0}', space=sflag, size = 0x4, scoped, tag = 'scoped memory for tpu_custom_call.1']
    #allocation5 [shape = 'u8[4096]{0}', space=vmem, size = 0x1000, scoped, tag = 'output window, operand 0, single buffered']
    %8 = vsyncpa [#allocation3], 0
    %9 = vsyncpa [#allocation4], 0
    // Predicated region
    $region2: #{tpu_custom_call.1} parent=1 // pred_check
      _
    $region3: #{tpu_custom_call.1} parent=1 // pred_check_branch
      %11 = sbr.rel (0) target = $region5
    $region4: #{tpu_custom_call.1} parent=1 // pred_region
      _
    $region5: #{tpu_custom_call.1} parent=1 // pred_fallthru
      _
    // Predicated region
    $region6: #{tpu_custom_call.1} parent=1 // pred_check
      _
    $region7: #{tpu_custom_call.1} parent=1 // pred_check_branch
      %13 = sbr.rel (0) target = $region9
    $region8: #{tpu_custom_call.1} parent=1 // pred_region
      %s15 = ssub.s32 128, 128
      %16 = vsyncadd [#allocation3], %s15
      %s18 = sshll.u32 [#allocation2], 4
      %s19 = int_to_ptr.vmem [resolvable:$true] %s18
      %21 = dma.hbm_to_vmem [thread:$0]  %s1, 128, %s19, [#allocation3]
    $region9: #{tpu_custom_call.1} parent=1 // pred_fallthru
      _
    // Predicated region
    $region10: #{tpu_custom_call.1} parent=1 // pred_check
      _
    $region11: #{tpu_custom_call.1} parent=1 // pred_check_branch
      %23 = sbr.rel (0) target = $region13
    $region12: #{tpu_custom_call.1} parent=1 // pred_region
      _
    $region13: #{tpu_custom_call.1} parent=1 // pred_fallthru
      _
    // Predicated region
    $region14: #{tpu_custom_call.1} parent=1 // pred_check
      _
    $region15: #{tpu_custom_call.1} parent=1 // pred_check_branch
      %25 = sbr.rel (0) target = $region17
    $region16: #{tpu_custom_call.1} parent=1 // pred_region
      %26 = dma.done [#allocation3], 128
    $region17: #{tpu_custom_call.1} parent=1 // pred_fallthru
      _
    %v27 = vld [vmem:[%s0] sm:$0xff]
    %v28 = vlaneseq
    %v29 = vand.u32 %v28, 127
    %vm30 = vcmp.lt.s32.totalorder %v29, 0
    %v31 = vsub.s32 0, %v29
    %v32 = vsel %vm30, %v31, %v29
    %v33 = vshrl.u32 %v32, 4
    %v34 = vand.u32 %v32, 15
    %v35 = vsub.s32 0, %v34
    %v36 = vsel %vm30, %v35, %v34
    %vm37 = vcmp.ne.s32.totalorder %v36, 0
    %vm38 = vcmp.lt.s32.totalorder %v36, 0
    %vm39 = vmand %vm38, %vm37
    %v40 = vadd.s32 %v36, 16
    %v41 = vsel %vm39, %v40, %v36
    %vm42 = vcmask 1047808
    %43 = vrot.lane.b32.xlu0 %v27, 32
    %v44 = vpop.permute.xlu0 %43
    %v45 = vsel %vm42, %v44, %v27
    %46 = vrot.lane.b32.xlu0 %v45, 32
    %v47 = vpop.permute.xlu0 %46
    %v48 = vsel %vm42, %v47, %v27
    %vm49 = vcmp.ge.s32.totalorder %v41, 3
    %vm50 = vcmp.lt.s32.totalorder %v41, 19
    %vm51 = vmand %vm49, %vm50
    %53 = vrot.lane.b32.xlu0 %v48, 99
    %v54 = vpop.permute.xlu0 %53
    %v56 = vsel %vm51, %v54, 0.0
    %vm57 = vcmp.ge.s32.totalorder %v41, 2
    %vm58 = vcmp.lt.s32.totalorder %v41, 18
    %vm59 = vmand %vm57, %vm58
    %60 = vrot.lane.b32.xlu0 %v48, 98
    %v61 = vpop.permute.xlu0 %60
    %v63 = vsel %vm59, %v61, 0.0
    %vm64 = vcmp.ge.s32.totalorder %v41, 1
    %vm65 = vcmp.lt.s32.totalorder %v41, 17
    %vm66 = vmand %vm64, %vm65
    %67 = vrot.lane.b32.xlu0 %v48, 97
    %v68 = vpop.permute.xlu0 %67
    %v70 = vsel %vm66, %v68, 0.0
    %vm71 = vcmp.ge.s32.totalorder %v41, 0
    %vm72 = vcmp.lt.s32.totalorder %v41, 16
    %vm73 = vmand %vm71, %vm72
    %v74 = vsel %vm73, %v27, 0.0
    %vm75 = vcmp.ge.s32.totalorder %v41, 4294967295
    %vm76 = vcmp.lt.s32.totalorder %v41, 15
    %vm77 = vmand %vm75, %vm76
    %78 = vrot.lane.b32.xlu0 %v48, 127
    %v79 = vpop.permute.xlu0 %78
    %v81 = vsel %vm77, %v79, 0.0
    %vm82 = vcmp.ge.s32.totalorder %v41, 4294967294
    %vm83 = vcmp.lt.s32.totalorder %v41, 14
    %vm84 = vmand %vm82, %vm83
    %85 = vrot.lane.b32.xlu0 %v48, 126
    %v86 = vpop.permute.xlu0 %85
    %v88 = vsel %vm84, %v86, 0.0
    %vm89 = vcmp.ge.s32.totalorder %v41, 4294967293
    %vm90 = vcmp.lt.s32.totalorder %v41, 13
    %vm91 = vmand %vm89, %vm90
    %92 = vrot.lane.b32.xlu0 %v48, 125
    %v93 = vpop.permute.xlu0 %92
    %v95 = vsel %vm91, %v93, 0.0
    %v96 = vld [vmem:[#allocation2] sm:$0xff]
    %v97 = vld [vmem:[%s2] sm:$0xff]
    %99 = vset.pattern.permute.xlu0 0
    %100 = vperm.xlu0 %99, %v97
    %v101 = vpop.permute.xlu0 %100
    %vm103 = vcmask 457728
    %v105 = vsel %vm103, %v96, 0
    %107 = vmatprep.subr.mxu0 0.0
    %108 = vmatpush1.msra.mxu0 %v56
    %109 = vmatprep.subr.mxu0 0.0
    %110 = vmatpush1.msra.mxu0 %v63
    %111 = vmatprep.subr.mxu0 0.0
    %112 = vmatpush1.msra.mxu0 %v70
    %113 = vmatprep.subr.mxu0 0.0
    %114 = vmatpush1.msra.mxu0 %v74
    %115 = vmatprep.subr.mxu0 0.0
    %116 = vmatpush1.msra.mxu0 %v81
    %117 = vmatprep.subr.mxu0 0.0
    %118 = vmatpush1.msra.mxu0 %v88
    %119 = vmatprep.subr.mxu0 0.0
    %120 = vmatpush1.msra.mxu0 %v95
    %121 = vmatprep.subr.mxu0 0.0
    %122 = vmatpush1.msra.mxu0 0.0
    %123 = vmatprep.subr.mxu0 0.0
    %124 = vmatpush1.msra.mxu0 0.0
    %125 = vmatprep.subr.mxu0 0.0
    %126 = vmatpush1.msra.mxu0 0.0
    %127 = vmatprep.subr.mxu0 0.0
    %128 = vmatpush1.msra.mxu0 0.0
    %129 = vmatprep.subr.mxu0 0.0
    %130 = vmatpush1.msra.mxu0 0.0
    %131 = vmatprep.subr.mxu0 0.0
    %132 = vmatpush1.msra.mxu0 0.0
    %133 = vmatprep.subr.mxu0 0.0
    %134 = vmatpush1.msra.mxu0 0.0
    %135 = vmatprep.subr.mxu0 0.0
    %136 = vmatpush1.msra.mxu0 0.0
    %137 = vmatprep.subr.mxu0 0.0
    %138 = vmatpush1.msra.mxu0 0.0
    %139 = vmatprep.subr.mxu0 0.0
    %140 = vmatpush1.msra.mxu0 0.0
    %141 = vmatprep.subr.mxu0 0.0
    %142 = vmatpush1.msra.mxu0 0.0
    %143 = vmatprep.subr.mxu0 0.0
    %144 = vmatpush1.msra.mxu0 0.0
    %145 = vmatprep.subr.mxu0 0.0
    %146 = vmatpush1.msra.mxu0 0.0
    %147 = vmatprep.subr.mxu0 0.0
    %148 = vmatpush1.msra.mxu0 0.0
    %149 = vmatprep.subr.mxu0 0.0
    %150 = vmatpush1.msra.mxu0 0.0
    %151 = vmatprep.subr.mxu0 0.0
    %152 = vmatpush1.msra.mxu0 0.0
    %153 = vmatprep.subr.mxu0 0.0
    %154 = vmatpush1.msra.mxu0 0.0
    %155 = vmatprep.subr.mxu0 0.0
    %156 = vmatpush1.msra.mxu0 0.0
    %157 = vmatprep.subr.mxu0 0.0
    %158 = vmatpush1.msra.mxu0 0.0
    %159 = vmatprep.subr.mxu0 0.0
    %160 = vmatpush1.msra.mxu0 0.0
    %161 = vmatprep.subr.mxu0 0.0
    %162 = vmatpush1.msra.mxu0 0.0
    %163 = vmatprep.subr.mxu0 0.0
    %164 = vmatpush1.msra.mxu0 0.0
    %165 = vmatprep.subr.mxu0 0.0
    %166 = vmatpush1.msra.mxu0 0.0
    %167 = vmatprep.subr.mxu0 0.0
    %168 = vmatpush1.msra.mxu0 0.0
    %169 = vmatprep.subr.mxu0 0.0
    %170 = vmatpush1.msra.mxu0 0.0
    %171 = vmatprep.mubr.f32.mxu0 0.0
    %172 = vmatmul.mubr.f32.gmra.mrb[0].mxu0 %v105
    %v173 = vpop.f32.mrb[0].mxu0
    %v174 = vadd.f32 %v101, %v173
    %v175 = vpop.f32.mrb[0].mxu0
    %176 = vdwg.mxu0
    %v177 = vmax.f32 %v174, 0.0
    %vm178 = vcmask 261120
    %179 = vst.msk [vmem:[#allocation5] sm:$0xff] %vm178, %v177
    // Predicated region
    $region18: #{tpu_custom_call.1} parent=1 // pred_check
      _
    $region19: #{tpu_custom_call.1} parent=1 // pred_check_branch
      %181 = sbr.rel (0) target = $region21
    $region20: #{tpu_custom_call.1} parent=1 // pred_region
      %s183 = ssub.s32 128, 128
      %184 = vsyncadd [#allocation4], %s183
      %s186 = sshll.u32 [#allocation5], 4
      %s187 = int_to_ptr.vmem [resolvable:$true] %s186
      %189 = dma.vmem_to_hbm [thread:$0]  %s187, 128, %s3, [#allocation4]
    $region21: #{tpu_custom_call.1} parent=1 // pred_fallthru
      _
    // Predicated region
    $region22: #{tpu_custom_call.1} parent=1 // pred_check
      _
    $region23: #{tpu_custom_call.1} parent=1 // pred_check_branch
      %191 = sbr.rel (0) target = $region25
    $region24: #{tpu_custom_call.1} parent=1 // pred_region
      %192 = dma.done [#allocation4], 128
    $region25: #{tpu_custom_call.1} parent=1 // pred_fallthru
      _
    %193 = vsyncpa [#allocation3], 1
    %194 = vsyncpa [#allocation4], 1

</llo_original>
